<compile_context>
chip_gen: v6e
topology: v6e:2x2x1
jax: 0.10.0
libtpu: 0.0.40
codegen_flags: <defaults>
</compile_context>

<pallas_src>
import functools

import jax
import jax.numpy as jnp
import numpy as np
from jax.experimental import pallas as pl
from jax.experimental.pallas import tpu as pltpu


def _sh_kernel(d_ref, o_ref, *, basis_dim: int):
    # d_ref: (3, block_rows, 128), o_ref: (basis_dim, block_rows, 128)
    x = d_ref[0]
    y = d_ref[1]
    z = d_ref[2]

    o_ref[0] = jnp.full(x.shape, 0.28209479177387814, dtype=o_ref.dtype)
    if basis_dim > 1:
        o_ref[1] = -0.48860251190291987 * y
        o_ref[2] = 0.48860251190291987 * z
        o_ref[3] = -0.48860251190291987 * x
        if basis_dim > 4:
            x2, y2, z2 = x * x, y * y, z * z
            xy, yz, xz = x * y, y * z, x * z
            o_ref[4] = 1.0925484305920792 * xy
            o_ref[5] = -1.0925484305920792 * yz
            o_ref[6] = 0.94617469575756 * z2 - 0.31539156525252
            o_ref[7] = -1.0925484305920792 * xz
            o_ref[8] = 0.5462742152960396 * x2 - 0.5462742152960396 * y2
            if basis_dim > 9:
                # Hoisted verbatim subexpressions (shared across rows).
                x2_m_y2 = x2 - y2                 # rows 14 / 16 / 22
                m3x2_p_y2 = -3.0 * x2 + y2        # rows 9 / 17
                one_m_5z2 = 1.0 - 5.0 * z2        # rows 11 / 13
                mx2_p_3y2 = -x2 + 3.0 * y2        # rows 15 / 23
                o_ref[9] = 0.5900435899266435 * y * m3x2_p_y2
                o_ref[10] = 2.890611442640554 * xy * z
                o_ref[11] = 0.4570457994644657 * y * one_m_5z2
                o_ref[12] = 0.3731763325901154 * z * (5.0 * z2 - 3.0)
                o_ref[13] = 0.4570457994644657 * x * one_m_5z2
                o_ref[14] = 1.445305721320277 * z * x2_m_y2
                o_ref[15] = 0.5900435899266435 * x * mx2_p_3y2
                if basis_dim > 16:
                    x4, y4, z4 = x2 * x2, y2 * y2, z2 * z2
                    sevz2_m1 = 7.0 * z2 - 1.0     # rows 18 / 22
                    three_m_7z2 = 3.0 - 7.0 * z2  # rows 19 / 21
                    o_ref[16] = 2.5033429417967046 * xy * x2_m_y2
                    o_ref[17] = 1.7701307697799304 * yz * m3x2_p_y2
                    o_ref[18] = 0.9461746957575601 * xy * sevz2_m1
                    o_ref[19] = 0.6690465435572892 * yz * three_m_7z2
                    o_ref[20] = (-3.1735664074561294 * z2
                                 + 3.7024941420321507 * z4
                                 + 0.31735664074561293)
                    o_ref[21] = 0.6690465435572892 * xz * three_m_7z2
                    o_ref[22] = 0.47308734787878004 * x2_m_y2 * sevz2_m1
                    o_ref[23] = 1.7701307697799304 * xz * mx2_p_3y2
                    o_ref[24] = (-3.755014412695057 * x2 * y2
                                 + 0.6258357354491761 * x4
                                 + 0.6258357354491761 * y4)


def spherical_harmonics_encoding_ngp(dirs: jax.Array,
                                     sh_degree: int = 4,
                                     block_rows: int = 512) -> jax.Array:
    """Pallas implementation of SphericalHarmonicsEncoding_NGP.forward.

    block_rows: rows of 128 points per grid step (512 -> 65536 points/step,
    ~9.5 MiB of double-buffered blocks for sh_degree=4; fits v5e/v6e/v7x
    default scoped VMEM while keeping multiple grid steps for megacore).
    """
    assert sh_degree <= 5 and sh_degree > -1
    basis_dim = sh_degree ** 2
    lead_shape = dirs.shape[:-1]
    assert dirs.shape[-1] == 3

    if basis_dim == 0:
        return jnp.empty((*lead_shape, 0), dtype=dirs.dtype)

    n = int(np.prod(lead_shape)) if lead_shape else 1
    d_flat = dirs.reshape(n, 3)

    lanes = 128
    n_pad = pl.cdiv(n, lanes) * lanes
    if n_pad != n:
        d_flat = jnp.pad(d_flat, ((0, n_pad - n), (0, 0)))
    n_rows = n_pad // lanes

    # Channels-major, lane-dense layout: (3, n_rows, 128).
    d_cm = d_flat.T.reshape(3, n_rows, lanes)

    # Block over the sublane (rows) dimension; must be a multiple of 8 or the
    # full extent.  Ragged last blocks are handled by Pallas (masked writeback).
    if n_rows <= block_rows:
        br = n_rows
    else:
        br = max(8, (block_rows // 8) * 8)
    grid = (pl.cdiv(n_rows, br),)

    out_cm = pl.pallas_call(
        functools.partial(_sh_kernel, basis_dim=basis_dim),
        out_shape=jax.ShapeDtypeStruct((basis_dim, n_rows, lanes), dirs.dtype),
        grid=grid,
        in_specs=[pl.BlockSpec((3, br, lanes), lambda i: (0, i, 0))],
        out_specs=pl.BlockSpec((basis_dim, br, lanes), lambda i: (0, i, 0)),
        compiler_params=pltpu.CompilerParams(
            dimension_semantics=("parallel",)),
    )(d_cm)

    # Relayout back to the module's (..., basis_dim) output.
    out = out_cm.reshape(basis_dim, n_pad).T
    if n_pad != n:
        out = out[:n]
    return out.reshape(*lead_shape, basis_dim)


def _reference_sh(dirs: np.ndarray, sh_degree: int = 4) -> np.ndarray:
    """Pure NumPy reference mirroring the PyTorch forward (up to degree 5)."""
    basis_dim = sh_degree ** 2
    result = np.empty((*dirs.shape[:-1], basis_dim), dtype=dirs.dtype)
    result[..., 0] = 0.28209479177387814
    if basis_dim > 1:
        x, y, z = dirs[..., 0], dirs[..., 1], dirs[..., 2]
        result[..., 1] = -0.48860251190291987 * y
        result[..., 2] = 0.48860251190291987 * z
        result[..., 3] = -0.48860251190291987 * x
        if basis_dim > 4:
            x2, y2, z2 = x * x, y * y, z * z
            xy, yz, xz = x * y, y * z, x * z
            result[..., 4] = 1.0925484305920792 * xy
            result[..., 5] = -1.0925484305920792 * yz
            result[..., 6] = 0.94617469575756 * z2 - 0.31539156525252
            result[..., 7] = -1.0925484305920792 * xz
            result[..., 8] = 0.5462742152960396 * x2 - 0.5462742152960396 * y2
            if basis_dim > 9:
                result[..., 9] = 0.5900435899266435 * y * (-3.0 * x2 + y2)
                result[..., 10] = 2.890611442640554 * xy * z
                result[..., 11] = 0.4570457994644657 * y * (1.0 - 5.0 * z2)
                result[..., 12] = 0.3731763325901154 * z * (5.0 * z2 - 3.0)
                result[..., 13] = 0.4570457994644657 * x * (1.0 - 5.0 * z2)
                result[..., 14] = 1.445305721320277 * z * (x2 - y2)
                result[..., 15] = 0.5900435899266435 * x * (-x2 + 3.0 * y2)
                if basis_dim > 16:
                    x4, y4, z4 = x2 * x2, y2 * y2, z2 * z2
                    result[..., 16] = 2.5033429417967046 * xy * (x2 - y2)
                    result[..., 17] = 1.7701307697799304 * yz * (-3.0 * x2 + y2)
                    result[..., 18] = 0.9461746957575601 * xy * (7.0 * z2 - 1.0)
                    result[..., 19] = 0.6690465435572892 * yz * (3.0 - 7.0 * z2)
                    result[..., 20] = (-3.1735664074561294 * z2
                                       + 3.7024941420321507 * z4
                                       + 0.31735664074561293)
                    result[..., 21] = 0.6690465435572892 * xz * (3.0 - 7.0 * z2)
                    result[..., 22] = (0.47308734787878004 * (x2 - y2)
                                       * (7.0 * z2 - 1.0))
                    result[..., 23] = 1.7701307697799304 * xz * (-x2 + 3.0 * y2)
                    result[..., 24] = (-3.755014412695057 * x2 * y2
                                       + 0.6258357354491761 * x4
                                       + 0.6258357354491761 * y4)
    return result


if __name__ == "__main__":
    # Case 1: module-like small shape (batch=2, rays=64), default sh_degree=4.
    key = jax.random.PRNGKey(0)
    dirs = jax.random.normal(key, (2, 64, 3), dtype=jnp.float32)
    dirs = dirs / jnp.linalg.norm(dirs, axis=-1, keepdims=True)

    out = spherical_harmonics_encoding_ngp(dirs, sh_degree=4)
    out = jax.block_until_ready(out)
    ref = _reference_sh(np.asarray(dirs), sh_degree=4)
    assert out.shape == (2, 64, 16), out.shape
    np.testing.assert_allclose(np.asarray(out), ref, rtol=1e-5, atol=1e-6)

    # Case 2: ragged N (not a multiple of 128), multi-step grid (block_rows=8,
    # n_rows=11 -> 2 grid steps, ragged last block), degree-5 path exercised.
    dirs2 = jax.random.normal(jax.random.PRNGKey(0), (1283, 3),
                              dtype=jnp.float32)
    dirs2 = dirs2 / jnp.linalg.norm(dirs2, axis=-1, keepdims=True)

    out2 = spherical_harmonics_encoding_ngp(dirs2, sh_degree=5, block_rows=8)
    out2 = jax.block_until_ready(out2)
    ref2 = _reference_sh(np.asarray(dirs2), sh_degree=5)
    assert out2.shape == (1283, 25), out2.shape
    np.testing.assert_allclose(np.asarray(out2), ref2, rtol=1e-5, atol=1e-6)

    print("KERNEL_OK")
</pallas_src>

<mosaic_0001>
module attributes {stable_mosaic.version = 11 : i64} {
  func.func @_sh_kernel(%arg0: i32, %arg1: memref<3x1x128xf32, #tpu.memory_space<vmem>>, %arg2: memref<16x1x128xf32, #tpu.memory_space<vmem>>) attributes {dimension_semantics = [#tpu.dimension_semantics<parallel>], iteration_bounds = array<i64: 1>, scalar_prefetch = 0 : i64, scratch_operands = 0 : i64, tpu.core_type = #tpu.core_type<tc>, window_params = [{transform_indices = @transform_0, window_bounds = array<i64: 3, 1, 128>}, {transform_indices = @transform_1, window_bounds = array<i64: 16, 1, 128>}]} {
    %c0 = arith.constant 0 : index
    %c0_0 = arith.constant 0 : index
    %c0_1 = arith.constant 0 : index
    %0 = vector.load %arg1[%c0, %c0_0, %c0_1] : memref<3x1x128xf32, #tpu.memory_space<vmem>>, vector<1x1x128xf32>
    %1 = vector.shape_cast %0 : vector<1x1x128xf32> to vector<1x128xf32>
    %c1 = arith.constant 1 : index
    %c0_2 = arith.constant 0 : index
    %c0_3 = arith.constant 0 : index
    %2 = vector.load %arg1[%c1, %c0_2, %c0_3] : memref<3x1x128xf32, #tpu.memory_space<vmem>>, vector<1x1x128xf32>
    %3 = vector.shape_cast %2 : vector<1x1x128xf32> to vector<1x128xf32>
    %c2 = arith.constant 2 : index
    %c0_4 = arith.constant 0 : index
    %c0_5 = arith.constant 0 : index
    %4 = vector.load %arg1[%c2, %c0_4, %c0_5] : memref<3x1x128xf32, #tpu.memory_space<vmem>>, vector<1x1x128xf32>
    %5 = vector.shape_cast %4 : vector<1x1x128xf32> to vector<1x128xf32>
    %cst = arith.constant 0.282094806 : f32
    %6 = vector.broadcast %cst : f32 to vector<1x128xf32>
    %c0_6 = arith.constant 0 : index
    %c0_7 = arith.constant 0 : index
    %c0_8 = arith.constant 0 : index
    %7 = vector.load %arg2[%c0_6, %c0_7, %c0_8] : memref<16x1x128xf32, #tpu.memory_space<vmem>>, vector<1x1x128xf32>
    %8 = vector.shape_cast %7 : vector<1x1x128xf32> to vector<1x128xf32>
    %9 = vector.shape_cast %6 : vector<1x128xf32> to vector<1x1x128xf32>
    tpu.vector_store %arg2[%c0_6, %c0_7, %c0_8], %9 {strides = array<i32>} : memref<16x1x128xf32, #tpu.memory_space<vmem>>, vector<1x1x128xf32>,
    %cst_9 = arith.constant -0.488602519 : f32
    %10 = vector.broadcast %cst_9 : f32 to vector<1x128xf32>
    %11 = arith.mulf %10, %3 : vector<1x128xf32>
    %c1_10 = arith.constant 1 : index
    %c0_11 = arith.constant 0 : index
    %c0_12 = arith.constant 0 : index
    %12 = vector.load %arg2[%c1_10, %c0_11, %c0_12] : memref<16x1x128xf32, #tpu.memory_space<vmem>>, vector<1x1x128xf32>
    %13 = vector.shape_cast %12 : vector<1x1x128xf32> to vector<1x128xf32>
    %14 = vector.shape_cast %11 : vector<1x128xf32> to vector<1x1x128xf32>
    tpu.vector_store %arg2[%c1_10, %c0_11, %c0_12], %14 {strides = array<i32>} : memref<16x1x128xf32, #tpu.memory_space<vmem>>, vector<1x1x128xf32>,
    %cst_13 = arith.constant 0.488602519 : f32
    %15 = vector.broadcast %cst_13 : f32 to vector<1x128xf32>
    %16 = arith.mulf %15, %5 : vector<1x128xf32>
    %c2_14 = arith.constant 2 : index
    %c0_15 = arith.constant 0 : index
    %c0_16 = arith.constant 0 : index
    %17 = vector.load %arg2[%c2_14, %c0_15, %c0_16] : memref<16x1x128xf32, #tpu.memory_space<vmem>>, vector<1x1x128xf32>
    %18 = vector.shape_cast %17 : vector<1x1x128xf32> to vector<1x128xf32>
    %19 = vector.shape_cast %16 : vector<1x128xf32> to vector<1x1x128xf32>
    tpu.vector_store %arg2[%c2_14, %c0_15, %c0_16], %19 {strides = array<i32>} : memref<16x1x128xf32, #tpu.memory_space<vmem>>, vector<1x1x128xf32>,
    %cst_17 = arith.constant -0.488602519 : f32
    %20 = vector.broadcast %cst_17 : f32 to vector<1x128xf32>
    %21 = arith.mulf %20, %1 : vector<1x128xf32>
    %c3 = arith.constant 3 : index
    %c0_18 = arith.constant 0 : index
    %c0_19 = arith.constant 0 : index
    %22 = vector.load %arg2[%c3, %c0_18, %c0_19] : memref<16x1x128xf32, #tpu.memory_space<vmem>>, vector<1x1x128xf32>
    %23 = vector.shape_cast %22 : vector<1x1x128xf32> to vector<1x128xf32>
    %24 = vector.shape_cast %21 : vector<1x128xf32> to vector<1x1x128xf32>
    tpu.vector_store %arg2[%c3, %c0_18, %c0_19], %24 {strides = array<i32>} : memref<16x1x128xf32, #tpu.memory_space<vmem>>, vector<1x1x128xf32>,
    %25 = arith.mulf %1, %1 : vector<1x128xf32>
    %26 = arith.mulf %3, %3 : vector<1x128xf32>
    %27 = arith.mulf %5, %5 : vector<1x128xf32>
    %28 = arith.mulf %1, %3 : vector<1x128xf32>
    %29 = arith.mulf %3, %5 : vector<1x128xf32>
    %30 = arith.mulf %1, %5 : vector<1x128xf32>
    %cst_20 = arith.constant 1.09254849 : f32
    %31 = vector.broadcast %cst_20 : f32 to vector<1x128xf32>
    %32 = arith.mulf %31, %28 : vector<1x128xf32>
    %c4 = arith.constant 4 : index
    %c0_21 = arith.constant 0 : index
    %c0_22 = arith.constant 0 : index
    %33 = vector.load %arg2[%c4, %c0_21, %c0_22] : memref<16x1x128xf32, #tpu.memory_space<vmem>>, vector<1x1x128xf32>
    %34 = vector.shape_cast %33 : vector<1x1x128xf32> to vector<1x128xf32>
    %35 = vector.shape_cast %32 : vector<1x128xf32> to vector<1x1x128xf32>
    tpu.vector_store %arg2[%c4, %c0_21, %c0_22], %35 {strides = array<i32>} : memref<16x1x128xf32, #tpu.memory_space<vmem>>, vector<1x1x128xf32>,
    %cst_23 = arith.constant -1.09254849 : f32
    %36 = vector.broadcast %cst_23 : f32 to vector<1x128xf32>
    %37 = arith.mulf %36, %29 : vector<1x128xf32>
    %c5 = arith.constant 5 : index
    %c0_24 = arith.constant 0 : index
    %c0_25 = arith.constant 0 : index
    %38 = vector.load %arg2[%c5, %c0_24, %c0_25] : memref<16x1x128xf32, #tpu.memory_space<vmem>>, vector<1x1x128xf32>
    %39 = vector.shape_cast %38 : vector<1x1x128xf32> to vector<1x128xf32>
    %40 = vector.shape_cast %37 : vector<1x128xf32> to vector<1x1x128xf32>
    tpu.vector_store %arg2[%c5, %c0_24, %c0_25], %40 {strides = array<i32>} : memref<16x1x128xf32, #tpu.memory_space<vmem>>, vector<1x1x128xf32>,
    %cst_26 = arith.constant 0.946174681 : f32
    %41 = vector.broadcast %cst_26 : f32 to vector<1x128xf32>
    %42 = arith.mulf %41, %27 : vector<1x128xf32>
    %cst_27 = arith.constant 0.31539157 : f32
    %43 = vector.broadcast %cst_27 : f32 to vector<1x128xf32>
    %44 = arith.subf %42, %43 : vector<1x128xf32>
    %c6 = arith.constant 6 : index
    %c0_28 = arith.constant 0 : index
    %c0_29 = arith.constant 0 : index
    %45 = vector.load %arg2[%c6, %c0_28, %c0_29] : memref<16x1x128xf32, #tpu.memory_space<vmem>>, vector<1x1x128xf32>
    %46 = vector.shape_cast %45 : vector<1x1x128xf32> to vector<1x128xf32>
    %47 = vector.shape_cast %44 : vector<1x128xf32> to vector<1x1x128xf32>
    tpu.vector_store %arg2[%c6, %c0_28, %c0_29], %47 {strides = array<i32>} : memref<16x1x128xf32, #tpu.memory_space<vmem>>, vector<1x1x128xf32>,
    %cst_30 = arith.constant -1.09254849 : f32
    %48 = vector.broadcast %cst_30 : f32 to vector<1x128xf32>
    %49 = arith.mulf %48, %30 : vector<1x128xf32>
    %c7 = arith.constant 7 : index
    %c0_31 = arith.constant 0 : index
    %c0_32 = arith.constant 0 : index
    %50 = vector.load %arg2[%c7, %c0_31, %c0_32] : memref<16x1x128xf32, #tpu.memory_space<vmem>>, vector<1x1x128xf32>
    %51 = vector.shape_cast %50 : vector<1x1x128xf32> to vector<1x128xf32>
    %52 = vector.shape_cast %49 : vector<1x128xf32> to vector<1x1x128xf32>
    tpu.vector_store %arg2[%c7, %c0_31, %c0_32], %52 {strides = array<i32>} : memref<16x1x128xf32, #tpu.memory_space<vmem>>, vector<1x1x128xf32>,
    %cst_33 = arith.constant 0.546274245 : f32
    %53 = vector.broadcast %cst_33 : f32 to vector<1x128xf32>
    %54 = arith.mulf %53, %25 : vector<1x128xf32>
    %cst_34 = arith.constant 0.546274245 : f32
    %55 = vector.broadcast %cst_34 : f32 to vector<1x128xf32>
    %56 = arith.mulf %55, %26 : vector<1x128xf32>
    %57 = arith.subf %54, %56 : vector<1x128xf32>
    %c8 = arith.constant 8 : index
    %c0_35 = arith.constant 0 : index
    %c0_36 = arith.constant 0 : index
    %58 = vector.load %arg2[%c8, %c0_35, %c0_36] : memref<16x1x128xf32, #tpu.memory_space<vmem>>, vector<1x1x128xf32>
    %59 = vector.shape_cast %58 : vector<1x1x128xf32> to vector<1x128xf32>
    %60 = vector.shape_cast %57 : vector<1x128xf32> to vector<1x1x128xf32>
    tpu.vector_store %arg2[%c8, %c0_35, %c0_36], %60 {strides = array<i32>} : memref<16x1x128xf32, #tpu.memory_space<vmem>>, vector<1x1x128xf32>,
    %61 = arith.subf %25, %26 : vector<1x128xf32>
    %cst_37 = arith.constant -3.000000e+00 : f32
    %62 = vector.broadcast %cst_37 : f32 to vector<1x128xf32>
    %63 = arith.mulf %62, %25 : vector<1x128xf32>
    %64 = arith.addf %63, %26 : vector<1x128xf32>
    %cst_38 = arith.constant 5.000000e+00 : f32
    %65 = vector.broadcast %cst_38 : f32 to vector<1x128xf32>
    %66 = arith.mulf %65, %27 : vector<1x128xf32>
    %cst_39 = arith.constant 1.000000e+00 : f32
    %67 = vector.broadcast %cst_39 : f32 to vector<1x128xf32>
    %68 = arith.subf %67, %66 : vector<1x128xf32>
    %cst_40 = arith.constant 0.000000e+00 : f32
    %69 = vector.broadcast %cst_40 : f32 to vector<1x128xf32>
    %70 = arith.subf %69, %25 : vector<1x128xf32>
    %cst_41 = arith.constant 3.000000e+00 : f32
    %71 = vector.broadcast %cst_41 : f32 to vector<1x128xf32>
    %72 = arith.mulf %71, %26 : vector<1x128xf32>
    %73 = arith.addf %70, %72 : vector<1x128xf32>
    %cst_42 = arith.constant 0.590043604 : f32
    %74 = vector.broadcast %cst_42 : f32 to vector<1x128xf32>
    %75 = arith.mulf %74, %3 : vector<1x128xf32>
    %76 = arith.mulf %75, %64 : vector<1x128xf32>
    %c9 = arith.constant 9 : index
    %c0_43 = arith.constant 0 : index
    %c0_44 = arith.constant 0 : index
    %77 = vector.load %arg2[%c9, %c0_43, %c0_44] : memref<16x1x128xf32, #tpu.memory_space<vmem>>, vector<1x1x128xf32>
    %78 = vector.shape_cast %77 : vector<1x1x128xf32> to vector<1x128xf32>
    %79 = vector.shape_cast %76 : vector<1x128xf32> to vector<1x1x128xf32>
    tpu.vector_store %arg2[%c9, %c0_43, %c0_44], %79 {strides = array<i32>} : memref<16x1x128xf32, #tpu.memory_space<vmem>>, vector<1x1x128xf32>,
    %cst_45 = arith.constant 2.89061141 : f32
    %80 = vector.broadcast %cst_45 : f32 to vector<1x128xf32>
    %81 = arith.mulf %80, %28 : vector<1x128xf32>
    %82 = arith.mulf %81, %5 : vector<1x128xf32>
    %c10 = arith.constant 10 : index
    %c0_46 = arith.constant 0 : index
    %c0_47 = arith.constant 0 : index
    %83 = vector.load %arg2[%c10, %c0_46, %c0_47] : memref<16x1x128xf32, #tpu.memory_space<vmem>>, vector<1x1x128xf32>
    %84 = vector.shape_cast %83 : vector<1x1x128xf32> to vector<1x128xf32>
    %85 = vector.shape_cast %82 : vector<1x128xf32> to vector<1x1x128xf32>
    tpu.vector_store %arg2[%c10, %c0_46, %c0_47], %85 {strides = array<i32>} : memref<16x1x128xf32, #tpu.memory_space<vmem>>, vector<1x1x128xf32>,
    %cst_48 = arith.constant 0.457045794 : f32
    %86 = vector.broadcast %cst_48 : f32 to vector<1x128xf32>
    %87 = arith.mulf %86, %3 : vector<1x128xf32>
    %88 = arith.mulf %87, %68 : vector<1x128xf32>
    %c11 = arith.constant 11 : index
    %c0_49 = arith.constant 0 : index
    %c0_50 = arith.constant 0 : index
    %89 = vector.load %arg2[%c11, %c0_49, %c0_50] : memref<16x1x128xf32, #tpu.memory_space<vmem>>, vector<1x1x128xf32>
    %90 = vector.shape_cast %89 : vector<1x1x128xf32> to vector<1x128xf32>
    %91 = vector.shape_cast %88 : vector<1x128xf32> to vector<1x1x128xf32>
    tpu.vector_store %arg2[%c11, %c0_49, %c0_50], %91 {strides = array<i32>} : memref<16x1x128xf32, #tpu.memory_space<vmem>>, vector<1x1x128xf32>,
    %cst_51 = arith.constant 0.373176336 : f32
    %92 = vector.broadcast %cst_51 : f32 to vector<1x128xf32>
    %93 = arith.mulf %92, %5 : vector<1x128xf32>
    %cst_52 = arith.constant 5.000000e+00 : f32
    %94 = vector.broadcast %cst_52 : f32 to vector<1x128xf32>
    %95 = arith.mulf %94, %27 : vector<1x128xf32>
    %cst_53 = arith.constant 3.000000e+00 : f32
    %96 = vector.broadcast %cst_53 : f32 to vector<1x128xf32>
    %97 = arith.subf %95, %96 : vector<1x128xf32>
    %98 = arith.mulf %93, %97 : vector<1x128xf32>
    %c12 = arith.constant 12 : index
    %c0_54 = arith.constant 0 : index
    %c0_55 = arith.constant 0 : index
    %99 = vector.load %arg2[%c12, %c0_54, %c0_55] : memref<16x1x128xf32, #tpu.memory_space<vmem>>, vector<1x1x128xf32>
    %100 = vector.shape_cast %99 : vector<1x1x128xf32> to vector<1x128xf32>
    %101 = vector.shape_cast %98 : vector<1x128xf32> to vector<1x1x128xf32>
    tpu.vector_store %arg2[%c12, %c0_54, %c0_55], %101 {strides = array<i32>} : memref<16x1x128xf32, #tpu.memory_space<vmem>>, vector<1x1x128xf32>,
    %cst_56 = arith.constant 0.457045794 : f32
    %102 = vector.broadcast %cst_56 : f32 to vector<1x128xf32>
    %103 = arith.mulf %102, %1 : vector<1x128xf32>
    %104 = arith.mulf %103, %68 : vector<1x128xf32>
    %c13 = arith.constant 13 : index
    %c0_57 = arith.constant 0 : index
    %c0_58 = arith.constant 0 : index
    %105 = vector.load %arg2[%c13, %c0_57, %c0_58] : memref<16x1x128xf32, #tpu.memory_space<vmem>>, vector<1x1x128xf32>
    %106 = vector.shape_cast %105 : vector<1x1x128xf32> to vector<1x128xf32>
    %107 = vector.shape_cast %104 : vector<1x128xf32> to vector<1x1x128xf32>
    tpu.vector_store %arg2[%c13, %c0_57, %c0_58], %107 {strides = array<i32>} : memref<16x1x128xf32, #tpu.memory_space<vmem>>, vector<1x1x128xf32>,
    %cst_59 = arith.constant 1.44530571 : f32
    %108 = vector.broadcast %cst_59 : f32 to vector<1x128xf32>
    %109 = arith.mulf %108, %5 : vector<1x128xf32>
    %110 = arith.mulf %109, %61 : vector<1x128xf32>
    %c14 = arith.constant 14 : index
    %c0_60 = arith.constant 0 : index
    %c0_61 = arith.constant 0 : index
    %111 = vector.load %arg2[%c14, %c0_60, %c0_61] : memref<16x1x128xf32, #tpu.memory_space<vmem>>, vector<1x1x128xf32>
    %112 = vector.shape_cast %111 : vector<1x1x128xf32> to vector<1x128xf32>
    %113 = vector.shape_cast %110 : vector<1x128xf32> to vector<1x1x128xf32>
    tpu.vector_store %arg2[%c14, %c0_60, %c0_61], %113 {strides = array<i32>} : memref<16x1x128xf32, #tpu.memory_space<vmem>>, vector<1x1x128xf32>,
    %cst_62 = arith.constant 0.590043604 : f32
    %114 = vector.broadcast %cst_62 : f32 to vector<1x128xf32>
    %115 = arith.mulf %114, %1 : vector<1x128xf32>
    %116 = arith.mulf %115, %73 : vector<1x128xf32>
    %c15 = arith.constant 15 : index
    %c0_63 = arith.constant 0 : index
    %c0_64 = arith.constant 0 : index
    %117 = vector.load %arg2[%c15, %c0_63, %c0_64] : memref<16x1x128xf32, #tpu.memory_space<vmem>>, vector<1x1x128xf32>
    %118 = vector.shape_cast %117 : vector<1x1x128xf32> to vector<1x128xf32>
    %119 = vector.shape_cast %116 : vector<1x128xf32> to vector<1x1x128xf32>
    tpu.vector_store %arg2[%c15, %c0_63, %c0_64], %119 {strides = array<i32>} : memref<16x1x128xf32, #tpu.memory_space<vmem>>, vector<1x1x128xf32>,
    return
  }
  func.func @transform_0(%arg0: i32) -> (i32, i32, i32) {
    %c0_i32 = arith.constant 0 : i32
    %c0_i32_0 = arith.constant 0 : i32
    %c0_i32_1 = arith.constant 0 : i32
    return %c0_i32, %arg0, %c0_i32_0 : i32, i32, i32
  }
  func.func @transform_1(%arg0: i32) -> (i32, i32, i32) {
    %c0_i32 = arith.constant 0 : i32
    %c0_i32_0 = arith.constant 0 : i32
    %c0_i32_1 = arith.constant 0 : i32
    return %c0_i32, %arg0, %c0_i32_0 : i32, i32, i32
  }
}

</mosaic_0001>

<llo_original>
// kernel: tpu_custom_call.1
$region0: #{tpu_custom_call.1}
  #allocation0 [shape = 'u32[]', space=smem, size = 0x4, offset = 0x4, fixed_abs, tag = 'smem constant byte address 0x4 - core index']
  #allocation1 [shape = 'u32[144,128]{1,0:T(1,128)}', space=vmem, size = 0x12000, scoped, tag = 'internal scratch']
  %s0 = inlined_call_operand.hbm [shape: f32[3,1,128], index: 0, kind: input, shape index: {}]
  %s1 = inlined_call_operand.hbm [shape: f32[16,1,128], index: 1, kind: output, shape index: {}]
  %s2 = sld [smem:[#allocation0]]
  $region18: #{tpu_custom_call.1} parent=0
    _
  %s4 = ssub.s32 1, %s2
  %s5 = scalar_select 0, %s4, %s2
  $region1: #{tpu_custom_call.1} parent=0
    #allocation2 [shape = 'u8[1536]{0}', space=vmem, size = 0x800, scoped, tag = 'input window, operand 0, single buffered']
    #allocation3 [shape = 's32[1]{0}', space=sflag, size = 0x4, scoped, tag = 'scoped memory for tpu_custom_call.1']
    #allocation4 [shape = 's32[1]{0}', space=sflag, size = 0x4, scoped, tag = 'scoped memory for tpu_custom_call.1']
    #allocation5 [shape = 'u8[8192]{0}', space=vmem, size = 0x2000, scoped, tag = 'output window, operand 0, single buffered']
    %6 = vsyncpa [#allocation3], 0
    %7 = vsyncpa [#allocation4], 0
    // Predicated region
    $region2: #{tpu_custom_call.1} parent=1 // pred_check
      _
    $region3: #{tpu_custom_call.1} parent=1 // pred_check_branch
      %9 = sbr.rel (0) target = $region5
    $region4: #{tpu_custom_call.1} parent=1 // pred_region
      %s11 = ssub.s32 48, 48
      %12 = vsyncadd [#allocation3], %s11
      %s13 = sshll.u32 [#allocation2], 4
      %s14 = int_to_ptr.vmem [resolvable:$true] %s13
      %19 = dma.hbm_to_vmem [thread:$0]  %s0, 48, %s14, [#allocation3], 16, 16, 1
    $region5: #{tpu_custom_call.1} parent=1 // pred_fallthru
      _
    // Predicated region
    $region6: #{tpu_custom_call.1} parent=1 // pred_check
      _
    $region7: #{tpu_custom_call.1} parent=1 // pred_check_branch
      %21 = sbr.rel (0) target = $region9
    $region8: #{tpu_custom_call.1} parent=1 // pred_region
      %22 = dma.done [#allocation3], 48
    $region9: #{tpu_custom_call.1} parent=1 // pred_fallthru
      _
    %v23 = vld [vmem:[#allocation2] sm:$0x1]
    %s24 = scalar_lea.vmem [#allocation2], 1
    %v25 = vld [vmem:[%s24] sm:$0x1]
    %s26 = scalar_lea.vmem [#allocation2], 2
    %v27 = vld [vmem:[%s26] sm:$0x1]
    %28 = vst [vmem:[#allocation5] sm:$0x1] 0.2820948
    %v29 = vmul.f32 %v25, -0.48860252
    %s30 = scalar_lea.vmem [#allocation5], 1
    %31 = vst [vmem:[%s30] sm:$0x1] %v29
    %v32 = vmul.f32 %v27, 0.48860252
    %s33 = scalar_lea.vmem [#allocation5], 2
    %34 = vst [vmem:[%s33] sm:$0x1] %v32
    %v35 = vmul.f32 %v23, -0.48860252
    %s36 = scalar_lea.vmem [#allocation5], 3
    %37 = vst [vmem:[%s36] sm:$0x1] %v35
    %v38 = vmul.f32 %v23, %v23
    %v39 = vmul.f32 %v25, %v25
    %v40 = vmul.f32 %v27, %v27
    %v41 = vmul.f32 %v23, %v25
    %v42 = vmul.f32 %v25, %v27
    %v43 = vmul.f32 %v23, %v27
    %v44 = vmul.f32 %v41, 1.0925485
    %s45 = scalar_lea.vmem [#allocation5], 4
    %46 = vst [vmem:[%s45] sm:$0x1] %v44
    %v47 = vmul.f32 %v42, -1.0925485
    %s48 = scalar_lea.vmem [#allocation5], 5
    %49 = vst [vmem:[%s48] sm:$0x1] %v47
    %v50 = vmul.f32 %v40, 0.9461747
    %v51 = vsub.f32 %v50, 0.31539157
    %s52 = scalar_lea.vmem [#allocation5], 6
    %53 = vst [vmem:[%s52] sm:$0x1] %v51
    %v54 = vmul.f32 %v43, -1.0925485
    %s55 = scalar_lea.vmem [#allocation5], 7
    %56 = vst [vmem:[%s55] sm:$0x1] %v54
    %v57 = vmul.f32 %v38, 0.54627424
    %v58 = vmul.f32 %v39, 0.54627424
    %v59 = vsub.f32 %v57, %v58
    %s60 = scalar_lea.vmem [#allocation5], 8
    %61 = vst [vmem:[%s60] sm:$0x1] %v59
    %v62 = vsub.f32 %v38, %v39
    %v63 = vmul.f32 %v38, -3.0
    %v64 = vadd.f32 %v63, %v39
    %v65 = vmul.f32 %v40, 5.0
    %v66 = vsub.f32 1.0, %v65
    %v67 = vsub.f32 0.0, %v38
    %v68 = vmul.f32 %v39, 3.0
    %v69 = vadd.f32 %v67, %v68
    %v70 = vmul.f32 %v25, 0.5900436
    %v71 = vmul.f32 %v70, %v64
    %s72 = scalar_lea.vmem [#allocation5], 9
    %73 = vst [vmem:[%s72] sm:$0x1] %v71
    %v74 = vmul.f32 %v41, 2.8906114
    %v75 = vmul.f32 %v74, %v27
    %s76 = scalar_lea.vmem [#allocation5], 10
    %77 = vst [vmem:[%s76] sm:$0x1] %v75
    %v78 = vmul.f32 %v25, 0.4570458
    %v79 = vmul.f32 %v78, %v66
    %s80 = scalar_lea.vmem [#allocation5], 11
    %81 = vst [vmem:[%s80] sm:$0x1] %v79
    %v82 = vmul.f32 %v27, 0.37317634
    %v83 = vsub.f32 %v65, 3.0
    %v84 = vmul.f32 %v82, %v83
    %s85 = scalar_lea.vmem [#allocation5], 12
    %86 = vst [vmem:[%s85] sm:$0x1] %v84
    %v87 = vmul.f32 %v23, 0.4570458
    %v88 = vmul.f32 %v87, %v66
    %s89 = scalar_lea.vmem [#allocation5], 13
    %90 = vst [vmem:[%s89] sm:$0x1] %v88
    %v91 = vmul.f32 %v27, 1.4453057
    %v92 = vmul.f32 %v91, %v62
    %s93 = scalar_lea.vmem [#allocation5], 14
    %94 = vst [vmem:[%s93] sm:$0x1] %v92
    %v95 = vmul.f32 %v23, 0.5900436
    %v96 = vmul.f32 %v95, %v69
    %s97 = scalar_lea.vmem [#allocation5], 15
    %98 = vst [vmem:[%s97] sm:$0x1] %v96
    // Predicated region
    $region10: #{tpu_custom_call.1} parent=1 // pred_check
      _
    $region11: #{tpu_custom_call.1} parent=1 // pred_check_branch
      %100 = sbr.rel (0) target = $region13
    $region12: #{tpu_custom_call.1} parent=1 // pred_region
      %s102 = ssub.s32 256, 256
      %103 = vsyncadd [#allocation4], %s102
      %s104 = sshll.u32 [#allocation5], 4
      %s105 = int_to_ptr.vmem [resolvable:$true] %s104
      %110 = dma.vmem_to_hbm [thread:$0]  %s105, 256, %s1, [#allocation4], 16, 16, 1
    $region13: #{tpu_custom_call.1} parent=1 // pred_fallthru
      _
    // Predicated region
    $region14: #{tpu_custom_call.1} parent=1 // pred_check
      _
    $region15: #{tpu_custom_call.1} parent=1 // pred_check_branch
      %112 = sbr.rel (0) target = $region17
    $region16: #{tpu_custom_call.1} parent=1 // pred_region
      %113 = dma.done [#allocation4], 256
    $region17: #{tpu_custom_call.1} parent=1 // pred_fallthru
      _
    %114 = vsyncpa [#allocation3], 1
    %115 = vsyncpa [#allocation4], 1

</llo_original>
